<compile_context>
chip_gen: v6e
topology: v6e:2x2x1
jax: 0.10.0
libtpu: 0.0.40
codegen_flags: <defaults>
</compile_context>

<pallas_src>
import jax
import jax.numpy as jnp
from jax.experimental import pallas as pl
from jax.experimental.pallas import tpu as pltpu


def mlp_kernel(xT_ref, w1T_ref, b1_ref, w2T_ref, b2_ref, w3_ref, b3_ref, o_ref):
    # Fused 3-layer MLP in transposed (feature-major) layout:
    #   h1 = relu(W1 @ x  + b1)   -> (6, TB)
    #   h2 = relu(W2 @ h1 + b2)   -> (4, TB)
    #   y  = sigmoid(w3 . h2 + b3)-> (1, TB)   lane-dense output row
    xT = xT_ref[...]                                                # (8, TB) f32

    h1 = jnp.dot(w1T_ref[...], xT, preferred_element_type=jnp.float32)
    h1 = jnp.maximum(h1 + b1_ref[...], 0.0)                         # (6, TB)

    h2 = jnp.dot(w2T_ref[...], h1, preferred_element_type=jnp.float32)
    h2 = jnp.maximum(h2 + b2_ref[...], 0.0)                         # (4, TB)

    # Final layer has output width 1: keep it off the MXU (which would be
    # >99% padding) — VPU multiply + sublane (XLU) reduce instead.
    h3 = jnp.sum(h2 * w3_ref[...], axis=0, keepdims=True) + b3_ref[...]  # (1, TB)
    o_ref[...] = jax.nn.sigmoid(h3).astype(o_ref.dtype)


def mlp_forward(x, w1, b1, w2, b2, w3, b3, *, lane_tile=128):
    """x: (B, 8) f32; w*: (in, out); b*: (out,).  Returns y: (B, 1) f32."""
    B, F = x.shape
    n_tiles = pl.cdiv(B, lane_tile)
    Bp = n_tiles * lane_tile

    # Layout plumbing outside the kernel (negligible cost):
    #   batch -> lanes, features -> sublanes, pad batch to a lane-tile multiple.
    xT = jnp.zeros((F, Bp), jnp.float32).at[:, :B].set(x.T)
    w1T = w1.T                                    # (6, 8)
    w2T = w2.T                                    # (4, 6)
    w3c = w3.reshape(-1, 1)                       # (4, 1) column
    b1c = b1.reshape(-1, 1)                       # (6, 1)
    b2c = b2.reshape(-1, 1)                       # (4, 1)
    b3c = b3.reshape(1, 1)                        # (1, 1)

    # Full-array blocks (satisfy the (8,128) rule via the "equals full dims"
    # escape); default memory space is VMEM, so weights stay resident.
    full = lambda a: pl.BlockSpec(a.shape, lambda i: (0,) * a.ndim)

    yT = pl.pallas_call(
        mlp_kernel,
        out_shape=jax.ShapeDtypeStruct((1, Bp), jnp.float32),
        grid=(n_tiles,),
        in_specs=[
            pl.BlockSpec((F, lane_tile), lambda i: (0, i)),   # x tile: batch on lanes
            full(w1T), full(b1c),
            full(w2T), full(b2c),
            full(w3c), full(b3c),
        ],
        out_specs=pl.BlockSpec((1, lane_tile), lambda i: (0, i)),  # lane-dense output
        compiler_params=pltpu.CompilerParams(
            dimension_semantics=("parallel",)),   # shard batch tiles across TCs (v7x)
    )(xT, w1T, b1c, w2T, b2c, w3c, b3c)

    return yT[0, :B].reshape(B, 1)


def init_params(key):
    # Deterministic init mimicking torch.nn.Linear default U(-1/sqrt(fan_in), ...).
    ks = jax.random.split(key, 6)

    def linear(kw, kb, fan_in, fan_out):
        bound = 1.0 / jnp.sqrt(jnp.float32(fan_in))
        w = jax.random.uniform(kw, (fan_in, fan_out), jnp.float32, -bound, bound)
        b = jax.random.uniform(kb, (fan_out,), jnp.float32, -bound, bound)
        return w, b

    w1, b1 = linear(ks[0], ks[1], 8, 6)
    w2, b2 = linear(ks[2], ks[3], 6, 4)
    w3, b3 = linear(ks[4], ks[5], 4, 1)
    return w1, b1, w2, b2, w3, b3


if __name__ == "__main__":
    key = jax.random.PRNGKey(0)
    k_x, k_p = jax.random.split(key)
    params = init_params(k_p)
    w1, b1, w2, b2, w3, b3 = params

    def reference(x):
        h1 = jnp.maximum(x @ w1 + b1, 0.0)
        h2 = jnp.maximum(h1 @ w2 + b2, 0.0)
        return jax.nn.sigmoid(h2 @ w3 + b3)

    # Small PyTorch-like batch (exercises the padding path) and a multi-tile
    # batch (exercises the parallel grid / lane-dense output path).
    for B in (8, 256):
        x = jax.random.normal(jax.random.fold_in(k_x, B), (B, 8), jnp.float32)
        y = jax.block_until_ready(mlp_forward(x, *params))
        assert y.shape == (B, 1)
        assert jnp.allclose(y, reference(x), atol=1e-5, rtol=1e-5)

    print("KERNEL_OK")
</pallas_src>

<mosaic_0001>
module attributes {stable_mosaic.version = 11 : i64} {
  func.func @mlp_kernel(%arg0: i32, %arg1: memref<8x128xf32, #tpu.memory_space<vmem>>, %arg2: memref<6x8xf32, #tpu.memory_space<vmem>>, %arg3: memref<6x1xf32, #tpu.memory_space<vmem>>, %arg4: memref<4x6xf32, #tpu.memory_space<vmem>>, %arg5: memref<4x1xf32, #tpu.memory_space<vmem>>, %arg6: memref<4x1xf32, #tpu.memory_space<vmem>>, %arg7: memref<1x1xf32, #tpu.memory_space<vmem>>, %arg8: memref<1x128xf32, #tpu.memory_space<vmem>>) attributes {dimension_semantics = [#tpu.dimension_semantics<parallel>], iteration_bounds = array<i64: 1>, scalar_prefetch = 0 : i64, scratch_operands = 0 : i64, tpu.core_type = #tpu.core_type<tc>, window_params = [{transform_indices = @transform_0, window_bounds = array<i64: 8, 128>}, {pipeline_mode = #tpu.pipeline_mode<synchronous>, transform_indices = @transform_1, window_bounds = array<i64: 6, 8>}, {pipeline_mode = #tpu.pipeline_mode<synchronous>, transform_indices = @transform_2, window_bounds = array<i64: 6, 1>}, {pipeline_mode = #tpu.pipeline_mode<synchronous>, transform_indices = @transform_3, window_bounds = array<i64: 4, 6>}, {pipeline_mode = #tpu.pipeline_mode<synchronous>, transform_indices = @transform_4, window_bounds = array<i64: 4, 1>}, {pipeline_mode = #tpu.pipeline_mode<synchronous>, transform_indices = @transform_5, window_bounds = array<i64: 4, 1>}, {pipeline_mode = #tpu.pipeline_mode<synchronous>, transform_indices = @transform_6, window_bounds = array<i64: 1, 1>}, {transform_indices = @transform_7, window_bounds = array<i64: 1, 128>}]} {
    %c0 = arith.constant 0 : index
    %c0_0 = arith.constant 0 : index
    %0 = vector.load %arg1[%c0, %c0_0] : memref<8x128xf32, #tpu.memory_space<vmem>>, vector<8x128xf32>
    %c0_1 = arith.constant 0 : index
    %c0_2 = arith.constant 0 : index
    %1 = vector.load %arg2[%c0_1, %c0_2] : memref<6x8xf32, #tpu.memory_space<vmem>>, vector<6x8xf32>
    %cst = arith.constant dense<0.000000e+00> : vector<6x128xf32>
    %2 = tpu.matmul %1, %0, %cst {dimension_numbers = #tpu.dot_dimension_numbers<[1], [0], [0], [1], [0, 0, 1, 1], [], []>} : vector<6x8xf32>, vector<8x128xf32>, vector<6x128xf32> -> vector<6x128xf32>
    %c0_3 = arith.constant 0 : index
    %c0_4 = arith.constant 0 : index
    %3 = vector.load %arg3[%c0_3, %c0_4] : memref<6x1xf32, #tpu.memory_space<vmem>>, vector<6x1xf32>
    %4 = vector.broadcast %3 : vector<6x1xf32> to vector<6x128xf32>
    %5 = arith.addf %2, %4 : vector<6x128xf32>
    %cst_5 = arith.constant 0.000000e+00 : f32
    %6 = vector.broadcast %cst_5 : f32 to vector<6x128xf32>
    %7 = arith.maximumf %5, %6 : vector<6x128xf32>
    %c0_6 = arith.constant 0 : index
    %c0_7 = arith.constant 0 : index
    %8 = vector.load %arg4[%c0_6, %c0_7] : memref<4x6xf32, #tpu.memory_space<vmem>>, vector<4x6xf32>
    %cst_8 = arith.constant dense<0.000000e+00> : vector<4x128xf32>
    %9 = tpu.matmul %8, %7, %cst_8 {dimension_numbers = #tpu.dot_dimension_numbers<[1], [0], [0], [1], [0, 0, 1, 1], [], []>} : vector<4x6xf32>, vector<6x128xf32>, vector<4x128xf32> -> vector<4x128xf32>
    %c0_9 = arith.constant 0 : index
    %c0_10 = arith.constant 0 : index
    %10 = vector.load %arg5[%c0_9, %c0_10] : memref<4x1xf32, #tpu.memory_space<vmem>>, vector<4x1xf32>
    %11 = vector.broadcast %10 : vector<4x1xf32> to vector<4x128xf32>
    %12 = arith.addf %9, %11 : vector<4x128xf32>
    %cst_11 = arith.constant 0.000000e+00 : f32
    %13 = vector.broadcast %cst_11 : f32 to vector<4x128xf32>
    %14 = arith.maximumf %12, %13 : vector<4x128xf32>
    %c0_12 = arith.constant 0 : index
    %c0_13 = arith.constant 0 : index
    %15 = vector.load %arg6[%c0_12, %c0_13] : memref<4x1xf32, #tpu.memory_space<vmem>>, vector<4x1xf32>
    %16 = vector.broadcast %15 : vector<4x1xf32> to vector<4x128xf32>
    %17 = arith.mulf %14, %16 : vector<4x128xf32>
    %cst_14 = arith.constant dense<0.000000e+00> : vector<128xf32>
    %18 = vector.multi_reduction <add>, %17, %cst_14 [0] : vector<4x128xf32> to vector<128xf32>
    %19 = vector.shape_cast %18 : vector<128xf32> to vector<1x128xf32>
    %c0_15 = arith.constant 0 : index
    %c0_16 = arith.constant 0 : index
    %20 = vector.load %arg7[%c0_15, %c0_16] : memref<1x1xf32, #tpu.memory_space<vmem>>, vector<1x1xf32>
    %21 = vector.broadcast %20 : vector<1x1xf32> to vector<1x128xf32>
    %22 = arith.addf %19, %21 : vector<1x128xf32>
    %23 = arith.negf %22 : vector<1x128xf32>
    %24 = math.exp %23 : vector<1x128xf32>
    %cst_17 = arith.constant 1.000000e+00 : f32
    %25 = vector.broadcast %cst_17 : f32 to vector<1x128xf32>
    %26 = arith.addf %25, %24 : vector<1x128xf32>
    %27 = arith.divf %25, %26 : vector<1x128xf32>
    %c0_18 = arith.constant 0 : index
    %c0_19 = arith.constant 0 : index
    %28 = vector.load %arg8[%c0_18, %c0_19] : memref<1x128xf32, #tpu.memory_space<vmem>>, vector<1x128xf32>
    tpu.vector_store %arg8[%c0_18, %c0_19], %27 {strides = array<i32>} : memref<1x128xf32, #tpu.memory_space<vmem>>, vector<1x128xf32>,
    return
  }
  func.func @transform_0(%arg0: i32) -> (i32, i32) {
    %c0_i32 = arith.constant 0 : i32
    %c0_i32_0 = arith.constant 0 : i32
    return %c0_i32, %arg0 : i32, i32
  }
  func.func @transform_1(%arg0: i32) -> (i32, i32) {
    %c0_i32 = arith.constant 0 : i32
    %c0_i32_0 = arith.constant 0 : i32
    %c0_i32_1 = arith.constant 0 : i32
    return %c0_i32, %c0_i32_0 : i32, i32
  }
  func.func @transform_2(%arg0: i32) -> (i32, i32) {
    %c0_i32 = arith.constant 0 : i32
    %c0_i32_0 = arith.constant 0 : i32
    %c0_i32_1 = arith.constant 0 : i32
    return %c0_i32, %c0_i32_0 : i32, i32
  }
  func.func @transform_3(%arg0: i32) -> (i32, i32) {
    %c0_i32 = arith.constant 0 : i32
    %c0_i32_0 = arith.constant 0 : i32
    %c0_i32_1 = arith.constant 0 : i32
    return %c0_i32, %c0_i32_0 : i32, i32
  }
  func.func @transform_4(%arg0: i32) -> (i32, i32) {
    %c0_i32 = arith.constant 0 : i32
    %c0_i32_0 = arith.constant 0 : i32
    %c0_i32_1 = arith.constant 0 : i32
    return %c0_i32, %c0_i32_0 : i32, i32
  }
  func.func @transform_5(%arg0: i32) -> (i32, i32) {
    %c0_i32 = arith.constant 0 : i32
    %c0_i32_0 = arith.constant 0 : i32
    %c0_i32_1 = arith.constant 0 : i32
    return %c0_i32, %c0_i32_0 : i32, i32
  }
  func.func @transform_6(%arg0: i32) -> (i32, i32) {
    %c0_i32 = arith.constant 0 : i32
    %c0_i32_0 = arith.constant 0 : i32
    %c0_i32_1 = arith.constant 0 : i32
    return %c0_i32, %c0_i32_0 : i32, i32
  }
  func.func @transform_7(%arg0: i32) -> (i32, i32) {
    %c0_i32 = arith.constant 0 : i32
    %c0_i32_0 = arith.constant 0 : i32
    return %c0_i32, %arg0 : i32, i32
  }
}

</mosaic_0001>

<llo_original>
// kernel: tpu_custom_call.1
$region0: #{tpu_custom_call.1}
  #allocation0 [shape = 'u32[]', space=smem, size = 0x4, offset = 0x4, fixed_abs, tag = 'smem constant byte address 0x4 - core index']
  #allocation1 [shape = 'u32[144,128]{1,0:T(1,128)}', space=vmem, size = 0x12000, scoped, tag = 'internal scratch']
  #allocation2 [shape = 'f32[1,1]{1,0:T(1,128)S(1)}', space=vmem, size = 0x200, scoped, tag = 'scoped memory for tpu_custom_call.1']
  %s0 = inlined_call_operand.vmem [shape: f32[8,128], index: 0, kind: input, shape index: {}]
  %s1 = inlined_call_operand.vmem [shape: f32[6,8], index: 1, kind: input, shape index: {}]
  %s2 = inlined_call_operand.vmem [shape: f32[6,1], index: 2, kind: input, shape index: {}]
  %s3 = inlined_call_operand.vmem [shape: f32[4,6], index: 3, kind: input, shape index: {}]
  %s4 = inlined_call_operand.vmem [shape: f32[4,1], index: 4, kind: input, shape index: {}]
  %s5 = inlined_call_operand.vmem [shape: f32[4,1], index: 5, kind: input, shape index: {}]
  %s6 = inlined_call_operand.<no memory space> [shape: f32[1,1], index: 6, kind: input, shape index: {}]
  %s7 = inlined_call_operand.hbm [shape: f32[1,128], index: 7, kind: output, shape index: {}]
  %s8 = sld [smem:[#allocation0]]
  $region38: #{tpu_custom_call.1} parent=0
    _
  %s10 = ssub.s32 1, %s8
  %s11 = scalar_select 0, %s10, %s8
  %v12 = vstv %s6
  %13 = vst [vmem:[#allocation2] sm:$0x1] %v12
  $region1: #{tpu_custom_call.1} parent=0
    #allocation3 [shape = 'u8[512]{0}', space=vmem, size = 0x400, scoped, tag = 'output window, operand 0, single buffered']
    #allocation4 [shape = 's32[1]{0}', space=sflag, size = 0x4, scoped, tag = 'scoped memory for tpu_custom_call.1']
    %14 = vsyncpa [#allocation4], 0
    // Predicated region
    $region2: #{tpu_custom_call.1} parent=1 // pred_check
      _
    $region3: #{tpu_custom_call.1} parent=1 // pred_check_branch
      %16 = sbr.rel (0) target = $region5
    $region4: #{tpu_custom_call.1} parent=1 // pred_region
      _
    $region5: #{tpu_custom_call.1} parent=1 // pred_fallthru
      _
    // Predicated region
    $region6: #{tpu_custom_call.1} parent=1 // pred_check
      _
    $region7: #{tpu_custom_call.1} parent=1 // pred_check_branch
      %18 = sbr.rel (0) target = $region9
    $region8: #{tpu_custom_call.1} parent=1 // pred_region
      _
    $region9: #{tpu_custom_call.1} parent=1 // pred_fallthru
      _
    // Predicated region
    $region10: #{tpu_custom_call.1} parent=1 // pred_check
      _
    $region11: #{tpu_custom_call.1} parent=1 // pred_check_branch
      %20 = sbr.rel (0) target = $region13
    $region12: #{tpu_custom_call.1} parent=1 // pred_region
      _
    $region13: #{tpu_custom_call.1} parent=1 // pred_fallthru
      _
    // Predicated region
    $region14: #{tpu_custom_call.1} parent=1 // pred_check
      _
    $region15: #{tpu_custom_call.1} parent=1 // pred_check_branch
      %22 = sbr.rel (0) target = $region17
    $region16: #{tpu_custom_call.1} parent=1 // pred_region
      _
    $region17: #{tpu_custom_call.1} parent=1 // pred_fallthru
      _
    // Predicated region
    $region18: #{tpu_custom_call.1} parent=1 // pred_check
      _
    $region19: #{tpu_custom_call.1} parent=1 // pred_check_branch
      %24 = sbr.rel (0) target = $region21
    $region20: #{tpu_custom_call.1} parent=1 // pred_region
      _
    $region21: #{tpu_custom_call.1} parent=1 // pred_fallthru
      _
    // Predicated region
    $region22: #{tpu_custom_call.1} parent=1 // pred_check
      _
    $region23: #{tpu_custom_call.1} parent=1 // pred_check_branch
      %26 = sbr.rel (0) target = $region25
    $region24: #{tpu_custom_call.1} parent=1 // pred_region
      _
    $region25: #{tpu_custom_call.1} parent=1 // pred_fallthru
      _
    // Predicated region
    $region26: #{tpu_custom_call.1} parent=1 // pred_check
      _
    $region27: #{tpu_custom_call.1} parent=1 // pred_check_branch
      %28 = sbr.rel (0) target = $region29
    $region28: #{tpu_custom_call.1} parent=1 // pred_region
      _
    $region29: #{tpu_custom_call.1} parent=1 // pred_fallthru
      _
    %v29 = vld [vmem:[%s0] sm:$0xff]
    %v30 = vld [vmem:[%s1] sm:$0x3f]
    %v31 = vld [vmem:[%s2] sm:$0x3f]
    %33 = vset.pattern.permute.xlu0 0
    %34 = vperm.xlu0 %33, %v31
    %v35 = vpop.permute.xlu0 %34
    %vm37 = vcmask 64512
    %v39 = vsel %vm37, %v30, 0
    %41 = vmatprep.subr.mxu0 0.0
    %42 = vmatpush1.msra.mxu0 0.0
    %43 = vmatprep.subr.mxu0 0.0
    %44 = vmatpush1.msra.mxu0 0.0
    %45 = vmatprep.subr.mxu0 0.0
    %46 = vmatpush1.msra.mxu0 0.0
    %47 = vmatprep.subr.mxu0 0.0
    %48 = vmatpush1.msra.mxu0 0.0
    %49 = vmatprep.subr.mxu0 0.0
    %50 = vmatpush1.msra.mxu0 0.0
    %51 = vmatprep.subr.mxu0 0.0
    %52 = vmatpush1.msra.mxu0 0.0
    %53 = vmatprep.subr.mxu0 0.0
    %54 = vmatpush1.msra.mxu0 0.0
    %55 = vmatprep.subr.mxu0 0.0
    %56 = vmatpush1.msra.mxu0 0.0
    %57 = vmatprep.subr.mxu0 0.0
    %58 = vmatpush1.msra.mxu0 0.0
    %59 = vmatprep.subr.mxu0 0.0
    %60 = vmatpush1.msra.mxu0 0.0
    %61 = vmatprep.subr.mxu0 0.0
    %62 = vmatpush1.msra.mxu0 0.0
    %63 = vmatprep.subr.mxu0 0.0
    %64 = vmatpush1.msra.mxu0 0.0
    %65 = vmatprep.subr.mxu0 0.0
    %66 = vmatpush1.msra.mxu0 0.0
    %67 = vmatprep.subr.mxu0 0.0
    %68 = vmatpush1.msra.mxu0 0.0
    %69 = vmatprep.subr.mxu0 0.0
    %70 = vmatpush1.msra.mxu0 0.0
    %71 = vmatprep.subr.mxu0 0.0
    %72 = vmatpush1.msra.mxu0 %v29
    %73 = vmatprep.subr.mxu0 0.0
    %74 = vmatpush2.msra.mxu0 0.0
    %75 = vmatprep.subr.mxu0 0.0
    %76 = vmatpush2.msra.mxu0 0.0
    %77 = vmatprep.subr.mxu0 0.0
    %78 = vmatpush2.msra.mxu0 0.0
    %79 = vmatprep.subr.mxu0 0.0
    %80 = vmatpush2.msra.mxu0 0.0
    %81 = vmatprep.subr.mxu0 0.0
    %82 = vmatpush2.msra.mxu0 0.0
    %83 = vmatprep.subr.mxu0 0.0
    %84 = vmatpush2.msra.mxu0 0.0
    %85 = vmatprep.subr.mxu0 0.0
    %86 = vmatpush2.msra.mxu0 0.0
    %87 = vmatprep.subr.mxu0 0.0
    %88 = vmatpush2.msra.mxu0 0.0
    %89 = vmatprep.subr.mxu0 0.0
    %90 = vmatpush2.msra.mxu0 0.0
    %91 = vmatprep.subr.mxu0 0.0
    %92 = vmatpush2.msra.mxu0 0.0
    %93 = vmatprep.subr.mxu0 0.0
    %94 = vmatpush2.msra.mxu0 0.0
    %95 = vmatprep.subr.mxu0 0.0
    %96 = vmatpush2.msra.mxu0 0.0
    %97 = vmatprep.subr.mxu0 0.0
    %98 = vmatpush2.msra.mxu0 0.0
    %99 = vmatprep.subr.mxu0 0.0
    %100 = vmatpush2.msra.mxu0 0.0
    %101 = vmatprep.subr.mxu0 0.0
    %102 = vmatpush2.msra.mxu0 0.0
    %103 = vmatprep.subr.mxu0 0.0
    %104 = vmatpush2.msra.mxu0 0.0
    %105 = vmatprep.mubr.f32.mxu0 0.0
    %106 = vmatmul.mubr.f32.gmra.mxu0 %v39
    %v107 = vpop.f32.mrf.mxu0
    %v108 = vadd.f32 %v35, %v107
    %v109 = vpop.f32.mrf.mxu0
    %110 = vdwg.mxu0
    %v111 = vmax.f32 %v108, 0.0
    %v112 = vld [vmem:[%s3] sm:$0xf]
    %v113 = vld [vmem:[%s4] sm:$0xf]
    %115 = vset.pattern.permute.xlu0 0
    %116 = vperm.xlu0 %115, %v113
    %v117 = vpop.permute.xlu0 %116
    %vm119 = vcmask 48128
    %v121 = vsel %vm119, %v112, 0
    %vm123 = vcmask 1045504
    %v125 = vsel %vm123, %v111, 0
    %127 = vmatprep.subr.mxu0 0.0
    %128 = vmatpush1.msra.mxu0 0.0
    %129 = vmatprep.subr.mxu0 0.0
    %130 = vmatpush1.msra.mxu0 0.0
    %131 = vmatprep.subr.mxu0 0.0
    %132 = vmatpush1.msra.mxu0 0.0
    %133 = vmatprep.subr.mxu0 0.0
    %134 = vmatpush1.msra.mxu0 0.0
    %135 = vmatprep.subr.mxu0 0.0
    %136 = vmatpush1.msra.mxu0 0.0
    %137 = vmatprep.subr.mxu0 0.0
    %138 = vmatpush1.msra.mxu0 0.0
    %139 = vmatprep.subr.mxu0 0.0
    %140 = vmatpush1.msra.mxu0 0.0
    %141 = vmatprep.subr.mxu0 0.0
    %142 = vmatpush1.msra.mxu0 0.0
    %143 = vmatprep.subr.mxu0 0.0
    %144 = vmatpush1.msra.mxu0 0.0
    %145 = vmatprep.subr.mxu0 0.0
    %146 = vmatpush1.msra.mxu0 0.0
    %147 = vmatprep.subr.mxu0 0.0
    %148 = vmatpush1.msra.mxu0 0.0
    %149 = vmatprep.subr.mxu0 0.0
    %150 = vmatpush1.msra.mxu0 0.0
    %151 = vmatprep.subr.mxu0 0.0
    %152 = vmatpush1.msra.mxu0 0.0
    %153 = vmatprep.subr.mxu0 0.0
    %154 = vmatpush1.msra.mxu0 0.0
    %155 = vmatprep.subr.mxu0 0.0
    %156 = vmatpush1.msra.mxu0 0.0
    %157 = vmatprep.subr.mxu0 0.0
    %158 = vmatpush1.msra.mxu0 %v125
    %159 = vmatprep.subr.mxu0 0.0
    %160 = vmatpush2.msra.mxu0 0.0
    %161 = vmatprep.subr.mxu0 0.0
    %162 = vmatpush2.msra.mxu0 0.0
    %163 = vmatprep.subr.mxu0 0.0
    %164 = vmatpush2.msra.mxu0 0.0
    %165 = vmatprep.subr.mxu0 0.0
    %166 = vmatpush2.msra.mxu0 0.0
    %167 = vmatprep.subr.mxu0 0.0
    %168 = vmatpush2.msra.mxu0 0.0
    %169 = vmatprep.subr.mxu0 0.0
    %170 = vmatpush2.msra.mxu0 0.0
    %171 = vmatprep.subr.mxu0 0.0
    %172 = vmatpush2.msra.mxu0 0.0
    %173 = vmatprep.subr.mxu0 0.0
    %174 = vmatpush2.msra.mxu0 0.0
    %175 = vmatprep.subr.mxu0 0.0
    %176 = vmatpush2.msra.mxu0 0.0
    %177 = vmatprep.subr.mxu0 0.0
    %178 = vmatpush2.msra.mxu0 0.0
    %179 = vmatprep.subr.mxu0 0.0
    %180 = vmatpush2.msra.mxu0 0.0
    %181 = vmatprep.subr.mxu0 0.0
    %182 = vmatpush2.msra.mxu0 0.0
    %183 = vmatprep.subr.mxu0 0.0
    %184 = vmatpush2.msra.mxu0 0.0
    %185 = vmatprep.subr.mxu0 0.0
    %186 = vmatpush2.msra.mxu0 0.0
    %187 = vmatprep.subr.mxu0 0.0
    %188 = vmatpush2.msra.mxu0 0.0
    %189 = vmatprep.subr.mxu0 0.0
    %190 = vmatpush2.msra.mxu0 0.0
    %191 = vmatprep.mubr.f32.mxu0 0.0
    %192 = vmatmul.mubr.f32.gmra.mxu0 %v121
    %v193 = vpop.f32.mrf.mxu0
    %v194 = vadd.f32 %v117, %v193
    %v195 = vpop.f32.mrf.mxu0
    %196 = vdwg.mxu0
    %v197 = vmax.f32 %v194, 0.0
    %v198 = vld [vmem:[%s5] sm:$0xf]
    %200 = vset.pattern.permute.xlu0 0
    %201 = vperm.xlu0 %200, %v198
    %v202 = vpop.permute.xlu0 %201
    %v204 = vmul.f32 %v197, %v202
    %vm205 = vcmask 1043456
    %v206 = vsel %vm205, %v204, 0.0
    %v207 = vrot.slane %v206, 4
    %v208 = vadd.f32 %v206, %v207
    %v209 = vrot.slane %v208, 2
    %v210 = vadd.f32 %v208, %v209
    %v211 = vrot.slane %v210, 1
    %v212 = vadd.f32 %v210, %v211
    %v213 = vld [vmem:[#allocation2] sm:$0x1]
    %215 = vset.pattern.permute.xlu0 0
    %216 = vperm.xlu0 %215, %v213
    %v217 = vpop.permute.xlu0 %216
    %v219 = vlaneseq
    %v220 = vshrl.u32 %v219, 7
    %v221 = vsub.s32 0, %v220
    %v222 = vrot.slane %v217, %v221
    %v223 = vadd.f32 %v212, %v222
    %v224 = vxor.u32 %v223, 2147483648
    %v225 = vmul.f32 %v224, 1.442695
    %v226 = vpow.pop %v225
    %v227 = vadd.f32 %v226, 1.0
    %v228 = vrcp.pop %v227
    %v229 = vmul.f32 1.0, %v228
    %230 = vst [vmem:[#allocation3] sm:$0x1] %v229
    // Predicated region
    $region30: #{tpu_custom_call.1} parent=1 // pred_check
      _
    $region31: #{tpu_custom_call.1} parent=1 // pred_check_branch
      %232 = sbr.rel (0) target = $region33
    $region32: #{tpu_custom_call.1} parent=1 // pred_region
      %s234 = ssub.s32 16, 16
      %235 = vsyncadd [#allocation4], %s234
      %s237 = sshll.u32 [#allocation3], 4
      %s238 = int_to_ptr.vmem [resolvable:$true] %s237
      %240 = dma.vmem_to_hbm [thread:$0]  %s238, 16, %s7, [#allocation4]
    $region33: #{tpu_custom_call.1} parent=1 // pred_fallthru
      _
    // Predicated region
    $region34: #{tpu_custom_call.1} parent=1 // pred_check
      _
    $region35: #{tpu_custom_call.1} parent=1 // pred_check_branch
      %242 = sbr.rel (0) target = $region37
    $region36: #{tpu_custom_call.1} parent=1 // pred_region
      %243 = dma.done [#allocation4], 16
    $region37: #{tpu_custom_call.1} parent=1 // pred_fallthru
      _
    %244 = vsyncpa [#allocation4], 1

</llo_original>
